<compile_context>
chip_gen: v6e
topology: v6e:2x2x1
jax: 0.10.0
libtpu: 0.0.40
codegen_flags: <defaults>
</compile_context>

<pallas_src>
import functools

import numpy as np
import jax
import jax.numpy as jnp
from jax.experimental import pallas as pl
from jax.experimental.pallas import tpu as pltpu

BASE_VOCAB = 32100   # the module hard-codes embed.weight[:32100]
TOK_BLK = 8          # tokens gathered per grid step -> full (8, 128) output tile


def _gather_block_kernel(n_prefix, ids_ref, base_hbm, prefix_hbm, out_ref, buf, sems):
    # ids_ref    : (n_tok_padded,) int32 token ids, scalar-prefetched into SMEM
    # base_hbm   : (V_base, D) base embedding table, left in HBM (pl.ANY)
    # prefix_hbm : (n_prefix, D) prompt-tuning table, left in HBM (pl.ANY)
    # out_ref    : (TOK_BLK, D) output tile for this grid step (VMEM)
    # buf        : (TOK_BLK, D) VMEM scratch holding the gathered rows
    # sems       : (TOK_BLK,) DMA completion semaphores (one per row in flight)
    i = pl.program_id(0)
    tok0 = i * TOK_BLK

    # Issue TOK_BLK single-row HBM->VMEM DMAs, each sourced from the base table
    # or the prefix table depending on the token id.
    for t in range(TOK_BLK):
        tok = ids_ref[tok0 + t]
        is_prefix = tok >= BASE_VOCAB

        @pl.when(is_prefix)
        def _(tok=tok, t=t):
            r = jnp.clip(tok - BASE_VOCAB, 0, n_prefix - 1)
            pltpu.make_async_copy(
                prefix_hbm.at[pl.ds(r, 1), :], buf.at[pl.ds(t, 1), :], sems.at[t]
            ).start()

        @pl.when(tok < BASE_VOCAB)
        def _(tok=tok, t=t):
            r = jnp.clip(tok, 0, BASE_VOCAB - 1)
            pltpu.make_async_copy(
                base_hbm.at[pl.ds(r, 1), :], buf.at[pl.ds(t, 1), :], sems.at[t]
            ).start()

    # Wait for all row DMAs of this block (both branches transfer identical
    # byte counts, so the wait descriptor's source ref is only a placeholder).
    for t in range(TOK_BLK):
        pltpu.make_async_copy(
            base_hbm.at[pl.ds(0, 1), :], buf.at[pl.ds(t, 1), :], sems.at[t]
        ).wait()

    # One dense, lane/sublane-aligned (TOK_BLK, D) store.
    out_ref[...] = buf[...]


def prompt_tuning_embedding(input_ids, base_weight, prefix_weight):
    """Equivalent of MyEmbedding.forward.

    input_ids:     (B, S) integer token ids in [0, 32100 + n_prefix)
    base_weight:   (>=32100, D) base embedding table
    prefix_weight: (n_prefix, D) prompt-tuning embedding table (same dtype)
    returns:       (B, S, D)
    """
    B, S = input_ids.shape
    D = base_weight.shape[1]
    n_prefix = prefix_weight.shape[0]

    flat_ids = input_ids.reshape(-1).astype(jnp.int32)
    n_tok = flat_ids.shape[0]
    n_pad = (-n_tok) % TOK_BLK
    if n_pad:
        flat_ids = jnp.concatenate([flat_ids, jnp.zeros((n_pad,), jnp.int32)])
    n_tok_padded = n_tok + n_pad

    kernel = functools.partial(_gather_block_kernel, n_prefix)

    out = pl.pallas_call(
        kernel,
        out_shape=jax.ShapeDtypeStruct((n_tok_padded, D), base_weight.dtype),
        grid_spec=pltpu.PrefetchScalarGridSpec(
            num_scalar_prefetch=1,                 # flat_ids -> SMEM
            grid=(n_tok_padded // TOK_BLK,),
            in_specs=[
                pl.BlockSpec(memory_space=pl.ANY),   # base table stays in HBM
                pl.BlockSpec(memory_space=pl.ANY),   # prefix table stays in HBM
            ],
            out_specs=pl.BlockSpec((TOK_BLK, D), lambda i, ids: (i, 0)),
            scratch_shapes=[
                pltpu.VMEM((TOK_BLK, D), base_weight.dtype),
                pltpu.SemaphoreType.DMA((TOK_BLK,)),
            ],
        ),
        compiler_params=pltpu.CompilerParams(
            dimension_semantics=("parallel",)),     # steps are self-contained
    )(flat_ids, base_weight, prefix_weight)

    return out[:n_tok].reshape(B, S, D)


if __name__ == "__main__":
    # Deterministic parameter / input construction (synthetic, no checkpoint).
    n_prefix = 8
    embed_dim = 128        # lane-aligned embedding dim
    B, S = 2, 8

    key = jax.random.PRNGKey(0)
    k_w, k_ids = jax.random.split(key)

    # Base embedding table (acts as `self.embed.weight`), exactly 32100 rows here.
    base_weight = jax.random.normal(k_w, (BASE_VOCAB, embed_dim), dtype=jnp.float32)

    # new_embed init: rows of the base table at a deterministic permutation of range(5000).
    rng = np.random.RandomState(0)
    indices = rng.permutation(5000)[:n_prefix]
    prefix_weight = base_weight[jnp.asarray(indices, dtype=jnp.int32)]

    # Input ids: mix of normal vocab ids and prefix ids (>= 32100).
    input_ids = jax.random.randint(
        k_ids, (B, S), minval=0, maxval=BASE_VOCAB + n_prefix, dtype=jnp.int32)
    # Force a couple of prefix-token lookups to exercise the prefix-table path.
    input_ids = input_ids.at[0, 0].set(BASE_VOCAB)                   # first prefix row
    input_ids = input_ids.at[1, -1].set(BASE_VOCAB + n_prefix - 1)   # last prefix row

    out = prompt_tuning_embedding(input_ids, base_weight, prefix_weight)
    out = jax.block_until_ready(out)

    # Reference check (plain JAX gather over the concatenated table).
    table_ref = jnp.concatenate([base_weight[:BASE_VOCAB], prefix_weight], axis=0)
    ref = jnp.take(table_ref, input_ids.reshape(-1), axis=0).reshape(B, S, embed_dim)
    assert out.shape == (B, S, embed_dim)
    np.testing.assert_allclose(np.asarray(out), np.asarray(ref), rtol=0, atol=0)

    print("KERNEL_OK")
</pallas_src>

<mosaic_0001>
module attributes {stable_mosaic.version = 11 : i64} {
  func.func @_gather_block_kernel(%arg0: i32, %arg1: memref<16xi32, #tpu.memory_space<smem>>, %arg2: memref<32100x128xf32, #tpu.memory_space<any>>, %arg3: memref<8x128xf32, #tpu.memory_space<any>>, %arg4: memref<8x128xf32, #tpu.memory_space<vmem>>, %arg5: memref<8x128xf32, #tpu.memory_space<vmem>>, %arg6: memref<8x!tpu.dma_semaphore, #tpu.memory_space<semaphore_mem>>) attributes {dimension_semantics = [#tpu.dimension_semantics<parallel>], iteration_bounds = array<i64: 2>, scalar_prefetch = 1 : i64, scratch_operands = 2 : i64, tpu.core_type = #tpu.core_type<tc>, window_params = [{}, {}, {transform_indices = @transform_2, window_bounds = array<i64: 8, 128>}]} {
    %c8_i32 = arith.constant 8 : i32
    %0 = arith.muli %arg0, %c8_i32 : i32
    %c0_i32 = arith.constant 0 : i32
    %1 = arith.addi %0, %c0_i32 : i32
    %2 = arith.index_cast %1 : i32 to index
    %3 = memref.load %arg1[%2] : memref<16xi32, #tpu.memory_space<smem>>
    %c32100_i32 = arith.constant 32100 : i32
    %4 = arith.cmpi sge, %3, %c32100_i32 : i32
    %5 = arith.extui %4 : i1 to i32
    %c0_i32_0 = arith.constant 0 : i32
    %6 = arith.cmpi ne, %5, %c0_i32_0 : i32
    scf.if %6 {
      %c32100_i32_74 = arith.constant 32100 : i32
      %107 = arith.subi %3, %c32100_i32_74 : i32
      %c0_i32_75 = arith.constant 0 : i32
      %c7_i32_76 = arith.constant 7 : i32
      %108 = arith.maxsi %c0_i32_75, %107 : i32
      %109 = arith.minsi %c7_i32_76, %108 : i32
      %c0_i32_77 = arith.constant 0 : i32
      %c0_i32_78 = arith.constant 0 : i32
      %110 = tpu.memref_slice %arg3[%109, %c0_i32_78] : memref<8x128xf32, #tpu.memory_space<any>> -> memref<1x128xf32, #tpu.memory_space<any>>
      %c0_i32_79 = arith.constant 0 : i32
      %c0_i32_80 = arith.constant 0 : i32
      %111 = tpu.memref_slice %arg5[%c0_i32_79, %c0_i32_80] : memref<8x128xf32, #tpu.memory_space<vmem>> -> memref<1x128xf32, #tpu.memory_space<vmem>>
      %112 = tpu.memref_slice %arg6[%c0_i32_77] : memref<8x!tpu.dma_semaphore, #tpu.memory_space<semaphore_mem>> -> memref<1x!tpu.dma_semaphore, #tpu.memory_space<semaphore_mem>>
      %113 = tpu.memref_squeeze %112 : memref<1x!tpu.dma_semaphore, #tpu.memory_space<semaphore_mem>> -> memref<!tpu.dma_semaphore, #tpu.memory_space<semaphore_mem>>
      tpu.enqueue_dma source(%110 : memref<1x128xf32, #tpu.memory_space<any>>) target(%111 : memref<1x128xf32, #tpu.memory_space<vmem>>) target_semaphore(%113 : memref<!tpu.dma_semaphore, #tpu.memory_space<semaphore_mem>>)
    } else {
    }
    %c32100_i32_1 = arith.constant 32100 : i32
    %7 = arith.cmpi slt, %3, %c32100_i32_1 : i32
    %8 = arith.extui %7 : i1 to i32
    %c0_i32_2 = arith.constant 0 : i32
    %9 = arith.cmpi ne, %8, %c0_i32_2 : i32
    scf.if %9 {
      %c0_i32_74 = arith.constant 0 : i32
      %c32099_i32 = arith.constant 32099 : i32
      %107 = arith.maxsi %c0_i32_74, %3 : i32
      %108 = arith.minsi %c32099_i32, %107 : i32
      %c0_i32_75 = arith.constant 0 : i32
      %c0_i32_76 = arith.constant 0 : i32
      %109 = tpu.memref_slice %arg2[%108, %c0_i32_76] : memref<32100x128xf32, #tpu.memory_space<any>> -> memref<1x128xf32, #tpu.memory_space<any>>
      %c0_i32_77 = arith.constant 0 : i32
      %c0_i32_78 = arith.constant 0 : i32
      %110 = tpu.memref_slice %arg5[%c0_i32_77, %c0_i32_78] : memref<8x128xf32, #tpu.memory_space<vmem>> -> memref<1x128xf32, #tpu.memory_space<vmem>>
      %111 = tpu.memref_slice %arg6[%c0_i32_75] : memref<8x!tpu.dma_semaphore, #tpu.memory_space<semaphore_mem>> -> memref<1x!tpu.dma_semaphore, #tpu.memory_space<semaphore_mem>>
      %112 = tpu.memref_squeeze %111 : memref<1x!tpu.dma_semaphore, #tpu.memory_space<semaphore_mem>> -> memref<!tpu.dma_semaphore, #tpu.memory_space<semaphore_mem>>
      tpu.enqueue_dma source(%109 : memref<1x128xf32, #tpu.memory_space<any>>) target(%110 : memref<1x128xf32, #tpu.memory_space<vmem>>) target_semaphore(%112 : memref<!tpu.dma_semaphore, #tpu.memory_space<semaphore_mem>>)
    } else {
    }
    %c1_i32 = arith.constant 1 : i32
    %10 = arith.addi %0, %c1_i32 : i32
    %11 = arith.index_cast %10 : i32 to index
    %12 = memref.load %arg1[%11] : memref<16xi32, #tpu.memory_space<smem>>
    %c32100_i32_3 = arith.constant 32100 : i32
    %13 = arith.cmpi sge, %12, %c32100_i32_3 : i32
    %14 = arith.extui %13 : i1 to i32
    %c0_i32_4 = arith.constant 0 : i32
    %15 = arith.cmpi ne, %14, %c0_i32_4 : i32
    scf.if %15 {
      %c32100_i32_74 = arith.constant 32100 : i32
      %107 = arith.subi %12, %c32100_i32_74 : i32
      %c0_i32_75 = arith.constant 0 : i32
      %c7_i32_76 = arith.constant 7 : i32
      %108 = arith.maxsi %c0_i32_75, %107 : i32
      %109 = arith.minsi %c7_i32_76, %108 : i32
      %c1_i32_77 = arith.constant 1 : i32
      %c0_i32_78 = arith.constant 0 : i32
      %110 = tpu.memref_slice %arg3[%109, %c0_i32_78] : memref<8x128xf32, #tpu.memory_space<any>> -> memref<1x128xf32, #tpu.memory_space<any>>
      %c1_i32_79 = arith.constant 1 : i32
      %c0_i32_80 = arith.constant 0 : i32
      %111 = tpu.memref_slice %arg5[%c1_i32_79, %c0_i32_80] : memref<8x128xf32, #tpu.memory_space<vmem>> -> memref<1x128xf32, #tpu.memory_space<vmem>>
      %112 = tpu.memref_slice %arg6[%c1_i32_77] : memref<8x!tpu.dma_semaphore, #tpu.memory_space<semaphore_mem>> -> memref<1x!tpu.dma_semaphore, #tpu.memory_space<semaphore_mem>>
      %113 = tpu.memref_squeeze %112 : memref<1x!tpu.dma_semaphore, #tpu.memory_space<semaphore_mem>> -> memref<!tpu.dma_semaphore, #tpu.memory_space<semaphore_mem>>
      tpu.enqueue_dma source(%110 : memref<1x128xf32, #tpu.memory_space<any>>) target(%111 : memref<1x128xf32, #tpu.memory_space<vmem>>) target_semaphore(%113 : memref<!tpu.dma_semaphore, #tpu.memory_space<semaphore_mem>>)
    } else {
    }
    %c32100_i32_5 = arith.constant 32100 : i32
    %16 = arith.cmpi slt, %12, %c32100_i32_5 : i32
    %17 = arith.extui %16 : i1 to i32
    %c0_i32_6 = arith.constant 0 : i32
    %18 = arith.cmpi ne, %17, %c0_i32_6 : i32
    scf.if %18 {
      %c0_i32_74 = arith.constant 0 : i32
      %c32099_i32 = arith.constant 32099 : i32
      %107 = arith.maxsi %c0_i32_74, %12 : i32
      %108 = arith.minsi %c32099_i32, %107 : i32
      %c1_i32_75 = arith.constant 1 : i32
      %c0_i32_76 = arith.constant 0 : i32
      %109 = tpu.memref_slice %arg2[%108, %c0_i32_76] : memref<32100x128xf32, #tpu.memory_space<any>> -> memref<1x128xf32, #tpu.memory_space<any>>
      %c1_i32_77 = arith.constant 1 : i32
      %c0_i32_78 = arith.constant 0 : i32
      %110 = tpu.memref_slice %arg5[%c1_i32_77, %c0_i32_78] : memref<8x128xf32, #tpu.memory_space<vmem>> -> memref<1x128xf32, #tpu.memory_space<vmem>>
      %111 = tpu.memref_slice %arg6[%c1_i32_75] : memref<8x!tpu.dma_semaphore, #tpu.memory_space<semaphore_mem>> -> memref<1x!tpu.dma_semaphore, #tpu.memory_space<semaphore_mem>>
      %112 = tpu.memref_squeeze %111 : memref<1x!tpu.dma_semaphore, #tpu.memory_space<semaphore_mem>> -> memref<!tpu.dma_semaphore, #tpu.memory_space<semaphore_mem>>
      tpu.enqueue_dma source(%109 : memref<1x128xf32, #tpu.memory_space<any>>) target(%110 : memref<1x128xf32, #tpu.memory_space<vmem>>) target_semaphore(%112 : memref<!tpu.dma_semaphore, #tpu.memory_space<semaphore_mem>>)
    } else {
    }
    %c2_i32 = arith.constant 2 : i32
    %19 = arith.addi %0, %c2_i32 : i32
    %20 = arith.index_cast %19 : i32 to index
    %21 = memref.load %arg1[%20] : memref<16xi32, #tpu.memory_space<smem>>
    %c32100_i32_7 = arith.constant 32100 : i32
    %22 = arith.cmpi sge, %21, %c32100_i32_7 : i32
    %23 = arith.extui %22 : i1 to i32
    %c0_i32_8 = arith.constant 0 : i32
    %24 = arith.cmpi ne, %23, %c0_i32_8 : i32
    scf.if %24 {
      %c32100_i32_74 = arith.constant 32100 : i32
      %107 = arith.subi %21, %c32100_i32_74 : i32
      %c0_i32_75 = arith.constant 0 : i32
      %c7_i32_76 = arith.constant 7 : i32
      %108 = arith.maxsi %c0_i32_75, %107 : i32
      %109 = arith.minsi %c7_i32_76, %108 : i32
      %c2_i32_77 = arith.constant 2 : i32
      %c0_i32_78 = arith.constant 0 : i32
      %110 = tpu.memref_slice %arg3[%109, %c0_i32_78] : memref<8x128xf32, #tpu.memory_space<any>> -> memref<1x128xf32, #tpu.memory_space<any>>
      %c2_i32_79 = arith.constant 2 : i32
      %c0_i32_80 = arith.constant 0 : i32
      %111 = tpu.memref_slice %arg5[%c2_i32_79, %c0_i32_80] : memref<8x128xf32, #tpu.memory_space<vmem>> -> memref<1x128xf32, #tpu.memory_space<vmem>>
      %112 = tpu.memref_slice %arg6[%c2_i32_77] : memref<8x!tpu.dma_semaphore, #tpu.memory_space<semaphore_mem>> -> memref<1x!tpu.dma_semaphore, #tpu.memory_space<semaphore_mem>>
      %113 = tpu.memref_squeeze %112 : memref<1x!tpu.dma_semaphore, #tpu.memory_space<semaphore_mem>> -> memref<!tpu.dma_semaphore, #tpu.memory_space<semaphore_mem>>
      tpu.enqueue_dma source(%110 : memref<1x128xf32, #tpu.memory_space<any>>) target(%111 : memref<1x128xf32, #tpu.memory_space<vmem>>) target_semaphore(%113 : memref<!tpu.dma_semaphore, #tpu.memory_space<semaphore_mem>>)
    } else {
    }
    %c32100_i32_9 = arith.constant 32100 : i32
    %25 = arith.cmpi slt, %21, %c32100_i32_9 : i32
    %26 = arith.extui %25 : i1 to i32
    %c0_i32_10 = arith.constant 0 : i32
    %27 = arith.cmpi ne, %26, %c0_i32_10 : i32
    scf.if %27 {
      %c0_i32_74 = arith.constant 0 : i32
      %c32099_i32 = arith.constant 32099 : i32
      %107 = arith.maxsi %c0_i32_74, %21 : i32
      %108 = arith.minsi %c32099_i32, %107 : i32
      %c2_i32_75 = arith.constant 2 : i32
      %c0_i32_76 = arith.constant 0 : i32
      %109 = tpu.memref_slice %arg2[%108, %c0_i32_76] : memref<32100x128xf32, #tpu.memory_space<any>> -> memref<1x128xf32, #tpu.memory_space<any>>
      %c2_i32_77 = arith.constant 2 : i32
      %c0_i32_78 = arith.constant 0 : i32
      %110 = tpu.memref_slice %arg5[%c2_i32_77, %c0_i32_78] : memref<8x128xf32, #tpu.memory_space<vmem>> -> memref<1x128xf32, #tpu.memory_space<vmem>>
      %111 = tpu.memref_slice %arg6[%c2_i32_75] : memref<8x!tpu.dma_semaphore, #tpu.memory_space<semaphore_mem>> -> memref<1x!tpu.dma_semaphore, #tpu.memory_space<semaphore_mem>>
      %112 = tpu.memref_squeeze %111 : memref<1x!tpu.dma_semaphore, #tpu.memory_space<semaphore_mem>> -> memref<!tpu.dma_semaphore, #tpu.memory_space<semaphore_mem>>
      tpu.enqueue_dma source(%109 : memref<1x128xf32, #tpu.memory_space<any>>) target(%110 : memref<1x128xf32, #tpu.memory_space<vmem>>) target_semaphore(%112 : memref<!tpu.dma_semaphore, #tpu.memory_space<semaphore_mem>>)
    } else {
    }
    %c3_i32 = arith.constant 3 : i32
    %28 = arith.addi %0, %c3_i32 : i32
    %29 = arith.index_cast %28 : i32 to index
    %30 = memref.load %arg1[%29] : memref<16xi32, #tpu.memory_space<smem>>
    %c32100_i32_11 = arith.constant 32100 : i32
    %31 = arith.cmpi sge, %30, %c32100_i32_11 : i32
    %32 = arith.extui %31 : i1 to i32
    %c0_i32_12 = arith.constant 0 : i32
    %33 = arith.cmpi ne, %32, %c0_i32_12 : i32
    scf.if %33 {
      %c32100_i32_74 = arith.constant 32100 : i32
      %107 = arith.subi %30, %c32100_i32_74 : i32
      %c0_i32_75 = arith.constant 0 : i32
      %c7_i32_76 = arith.constant 7 : i32
      %108 = arith.maxsi %c0_i32_75, %107 : i32
      %109 = arith.minsi %c7_i32_76, %108 : i32
      %c3_i32_77 = arith.constant 3 : i32
      %c0_i32_78 = arith.constant 0 : i32
      %110 = tpu.memref_slice %arg3[%109, %c0_i32_78] : memref<8x128xf32, #tpu.memory_space<any>> -> memref<1x128xf32, #tpu.memory_space<any>>
      %c3_i32_79 = arith.constant 3 : i32
      %c0_i32_80 = arith.constant 0 : i32
      %111 = tpu.memref_slice %arg5[%c3_i32_79, %c0_i32_80] : memref<8x128xf32, #tpu.memory_space<vmem>> -> memref<1x128xf32, #tpu.memory_space<vmem>>
      %112 = tpu.memref_slice %arg6[%c3_i32_77] : memref<8x!tpu.dma_semaphore, #tpu.memory_space<semaphore_mem>> -> memref<1x!tpu.dma_semaphore, #tpu.memory_space<semaphore_mem>>
      %113 = tpu.memref_squeeze %112 : memref<1x!tpu.dma_semaphore, #tpu.memory_space<semaphore_mem>> -> memref<!tpu.dma_semaphore, #tpu.memory_space<semaphore_mem>>
      tpu.enqueue_dma source(%110 : memref<1x128xf32, #tpu.memory_space<any>>) target(%111 : memref<1x128xf32, #tpu.memory_space<vmem>>) target_semaphore(%113 : memref<!tpu.dma_semaphore, #tpu.memory_space<semaphore_mem>>)
    } else {
    }
    %c32100_i32_13 = arith.constant 32100 : i32
    %34 = arith.cmpi slt, %30, %c32100_i32_13 : i32
    %35 = arith.extui %34 : i1 to i32
    %c0_i32_14 = arith.constant 0 : i32
    %36 = arith.cmpi ne, %35, %c0_i32_14 : i32
    scf.if %36 {
      %c0_i32_74 = arith.constant 0 : i32
      %c32099_i32 = arith.constant 32099 : i32
      %107 = arith.maxsi %c0_i32_74, %30 : i32
      %108 = arith.minsi %c32099_i32, %107 : i32
      %c3_i32_75 = arith.constant 3 : i32
      %c0_i32_76 = arith.constant 0 : i32
      %109 = tpu.memref_slice %arg2[%108, %c0_i32_76] : memref<32100x128xf32, #tpu.memory_space<any>> -> memref<1x128xf32, #tpu.memory_space<any>>
      %c3_i32_77 = arith.constant 3 : i32
      %c0_i32_78 = arith.constant 0 : i32
      %110 = tpu.memref_slice %arg5[%c3_i32_77, %c0_i32_78] : memref<8x128xf32, #tpu.memory_space<vmem>> -> memref<1x128xf32, #tpu.memory_space<vmem>>
      %111 = tpu.memref_slice %arg6[%c3_i32_75] : memref<8x!tpu.dma_semaphore, #tpu.memory_space<semaphore_mem>> -> memref<1x!tpu.dma_semaphore, #tpu.memory_space<semaphore_mem>>
      %112 = tpu.memref_squeeze %111 : memref<1x!tpu.dma_semaphore, #tpu.memory_space<semaphore_mem>> -> memref<!tpu.dma_semaphore, #tpu.memory_space<semaphore_mem>>
      tpu.enqueue_dma source(%109 : memref<1x128xf32, #tpu.memory_space<any>>) target(%110 : memref<1x128xf32, #tpu.memory_space<vmem>>) target_semaphore(%112 : memref<!tpu.dma_semaphore, #tpu.memory_space<semaphore_mem>>)
    } else {
    }
    %c4_i32 = arith.constant 4 : i32
    %37 = arith.addi %0, %c4_i32 : i32
    %38 = arith.index_cast %37 : i32 to index
    %39 = memref.load %arg1[%38] : memref<16xi32, #tpu.memory_space<smem>>
    %c32100_i32_15 = arith.constant 32100 : i32
    %40 = arith.cmpi sge, %39, %c32100_i32_15 : i32
    %41 = arith.extui %40 : i1 to i32
    %c0_i32_16 = arith.constant 0 : i32
    %42 = arith.cmpi ne, %41, %c0_i32_16 : i32
    scf.if %42 {
      %c32100_i32_74 = arith.constant 32100 : i32
      %107 = arith.subi %39, %c32100_i32_74 : i32
      %c0_i32_75 = arith.constant 0 : i32
      %c7_i32_76 = arith.constant 7 : i32
      %108 = arith.maxsi %c0_i32_75, %107 : i32
      %109 = arith.minsi %c7_i32_76, %108 : i32
      %c4_i32_77 = arith.constant 4 : i32
      %c0_i32_78 = arith.constant 0 : i32
      %110 = tpu.memref_slice %arg3[%109, %c0_i32_78] : memref<8x128xf32, #tpu.memory_space<any>> -> memref<1x128xf32, #tpu.memory_space<any>>
      %c4_i32_79 = arith.constant 4 : i32
      %c0_i32_80 = arith.constant 0 : i32
      %111 = tpu.memref_slice %arg5[%c4_i32_79, %c0_i32_80] : memref<8x128xf32, #tpu.memory_space<vmem>> -> memref<1x128xf32, #tpu.memory_space<vmem>>
      %112 = tpu.memref_slice %arg6[%c4_i32_77] : memref<8x!tpu.dma_semaphore, #tpu.memory_space<semaphore_mem>> -> memref<1x!tpu.dma_semaphore, #tpu.memory_space<semaphore_mem>>
      %113 = tpu.memref_squeeze %112 : memref<1x!tpu.dma_semaphore, #tpu.memory_space<semaphore_mem>> -> memref<!tpu.dma_semaphore, #tpu.memory_space<semaphore_mem>>
      tpu.enqueue_dma source(%110 : memref<1x128xf32, #tpu.memory_space<any>>) target(%111 : memref<1x128xf32, #tpu.memory_space<vmem>>) target_semaphore(%113 : memref<!tpu.dma_semaphore, #tpu.memory_space<semaphore_mem>>)
    } else {
    }
    %c32100_i32_17 = arith.constant 32100 : i32
    %43 = arith.cmpi slt, %39, %c32100_i32_17 : i32
    %44 = arith.extui %43 : i1 to i32
    %c0_i32_18 = arith.constant 0 : i32
    %45 = arith.cmpi ne, %44, %c0_i32_18 : i32
    scf.if %45 {
      %c0_i32_74 = arith.constant 0 : i32
      %c32099_i32 = arith.constant 32099 : i32
      %107 = arith.maxsi %c0_i32_74, %39 : i32
      %108 = arith.minsi %c32099_i32, %107 : i32
      %c4_i32_75 = arith.constant 4 : i32
      %c0_i32_76 = arith.constant 0 : i32
      %109 = tpu.memref_slice %arg2[%108, %c0_i32_76] : memref<32100x128xf32, #tpu.memory_space<any>> -> memref<1x128xf32, #tpu.memory_space<any>>
      %c4_i32_77 = arith.constant 4 : i32
      %c0_i32_78 = arith.constant 0 : i32
      %110 = tpu.memref_slice %arg5[%c4_i32_77, %c0_i32_78] : memref<8x128xf32, #tpu.memory_space<vmem>> -> memref<1x128xf32, #tpu.memory_space<vmem>>
      %111 = tpu.memref_slice %arg6[%c4_i32_75] : memref<8x!tpu.dma_semaphore, #tpu.memory_space<semaphore_mem>> -> memref<1x!tpu.dma_semaphore, #tpu.memory_space<semaphore_mem>>
      %112 = tpu.memref_squeeze %111 : memref<1x!tpu.dma_semaphore, #tpu.memory_space<semaphore_mem>> -> memref<!tpu.dma_semaphore, #tpu.memory_space<semaphore_mem>>
      tpu.enqueue_dma source(%109 : memref<1x128xf32, #tpu.memory_space<any>>) target(%110 : memref<1x128xf32, #tpu.memory_space<vmem>>) target_semaphore(%112 : memref<!tpu.dma_semaphore, #tpu.memory_space<semaphore_mem>>)
    } else {
    }
    %c5_i32 = arith.constant 5 : i32
    %46 = arith.addi %0, %c5_i32 : i32
    %47 = arith.index_cast %46 : i32 to index
    %48 = memref.load %arg1[%47] : memref<16xi32, #tpu.memory_space<smem>>
    %c32100_i32_19 = arith.constant 32100 : i32
    %49 = arith.cmpi sge, %48, %c32100_i32_19 : i32
    %50 = arith.extui %49 : i1 to i32
    %c0_i32_20 = arith.constant 0 : i32
    %51 = arith.cmpi ne, %50, %c0_i32_20 : i32
    scf.if %51 {
      %c32100_i32_74 = arith.constant 32100 : i32
      %107 = arith.subi %48, %c32100_i32_74 : i32
      %c0_i32_75 = arith.constant 0 : i32
      %c7_i32_76 = arith.constant 7 : i32
      %108 = arith.maxsi %c0_i32_75, %107 : i32
      %109 = arith.minsi %c7_i32_76, %108 : i32
      %c5_i32_77 = arith.constant 5 : i32
      %c0_i32_78 = arith.constant 0 : i32
      %110 = tpu.memref_slice %arg3[%109, %c0_i32_78] : memref<8x128xf32, #tpu.memory_space<any>> -> memref<1x128xf32, #tpu.memory_space<any>>
      %c5_i32_79 = arith.constant 5 : i32
      %c0_i32_80 = arith.constant 0 : i32
      %111 = tpu.memref_slice %arg5[%c5_i32_79, %c0_i32_80] : memref<8x128xf32, #tpu.memory_space<vmem>> -> memref<1x128xf32, #tpu.memory_space<vmem>>
      %112 = tpu.memref_slice %arg6[%c5_i32_77] : memref<8x!tpu.dma_semaphore, #tpu.memory_space<semaphore_mem>> -> memref<1x!tpu.dma_semaphore, #tpu.memory_space<semaphore_mem>>
      %113 = tpu.memref_squeeze %112 : memref<1x!tpu.dma_semaphore, #tpu.memory_space<semaphore_mem>> -> memref<!tpu.dma_semaphore, #tpu.memory_space<semaphore_mem>>
      tpu.enqueue_dma source(%110 : memref<1x128xf32, #tpu.memory_space<any>>) target(%111 : memref<1x128xf32, #tpu.memory_space<vmem>>) target_semaphore(%113 : memref<!tpu.dma_semaphore, #tpu.memory_space<semaphore_mem>>)
    } else {
    }
    %c32100_i32_21 = arith.constant 32100 : i32
    %52 = arith.cmpi slt, %48, %c32100_i32_21 : i32
    %53 = arith.extui %52 : i1 to i32
    %c0_i32_22 = arith.constant 0 : i32
    %54 = arith.cmpi ne, %53, %c0_i32_22 : i32
    scf.if %54 {
      %c0_i32_74 = arith.constant 0 : i32
      %c32099_i32 = arith.constant 32099 : i32
      %107 = arith.maxsi %c0_i32_74, %48 : i32
      %108 = arith.minsi %c32099_i32, %107 : i32
      %c5_i32_75 = arith.constant 5 : i32
      %c0_i32_76 = arith.constant 0 : i32
      %109 = tpu.memref_slice %arg2[%108, %c0_i32_76] : memref<32100x128xf32, #tpu.memory_space<any>> -> memref<1x128xf32, #tpu.memory_space<any>>
      %c5_i32_77 = arith.constant 5 : i32
      %c0_i32_78 = arith.constant 0 : i32
      %110 = tpu.memref_slice %arg5[%c5_i32_77, %c0_i32_78] : memref<8x128xf32, #tpu.memory_space<vmem>> -> memref<1x128xf32, #tpu.memory_space<vmem>>
      %111 = tpu.memref_slice %arg6[%c5_i32_75] : memref<8x!tpu.dma_semaphore, #tpu.memory_space<semaphore_mem>> -> memref<1x!tpu.dma_semaphore, #tpu.memory_space<semaphore_mem>>
      %112 = tpu.memref_squeeze %111 : memref<1x!tpu.dma_semaphore, #tpu.memory_space<semaphore_mem>> -> memref<!tpu.dma_semaphore, #tpu.memory_space<semaphore_mem>>
      tpu.enqueue_dma source(%109 : memref<1x128xf32, #tpu.memory_space<any>>) target(%110 : memref<1x128xf32, #tpu.memory_space<vmem>>) target_semaphore(%112 : memref<!tpu.dma_semaphore, #tpu.memory_space<semaphore_mem>>)
    } else {
    }
    %c6_i32 = arith.constant 6 : i32
    %55 = arith.addi %0, %c6_i32 : i32
    %56 = arith.index_cast %55 : i32 to index
    %57 = memref.load %arg1[%56] : memref<16xi32, #tpu.memory_space<smem>>
    %c32100_i32_23 = arith.constant 32100 : i32
    %58 = arith.cmpi sge, %57, %c32100_i32_23 : i32
    %59 = arith.extui %58 : i1 to i32
    %c0_i32_24 = arith.constant 0 : i32
    %60 = arith.cmpi ne, %59, %c0_i32_24 : i32
    scf.if %60 {
      %c32100_i32_74 = arith.constant 32100 : i32
      %107 = arith.subi %57, %c32100_i32_74 : i32
      %c0_i32_75 = arith.constant 0 : i32
      %c7_i32_76 = arith.constant 7 : i32
      %108 = arith.maxsi %c0_i32_75, %107 : i32
      %109 = arith.minsi %c7_i32_76, %108 : i32
      %c6_i32_77 = arith.constant 6 : i32
      %c0_i32_78 = arith.constant 0 : i32
      %110 = tpu.memref_slice %arg3[%109, %c0_i32_78] : memref<8x128xf32, #tpu.memory_space<any>> -> memref<1x128xf32, #tpu.memory_space<any>>
      %c6_i32_79 = arith.constant 6 : i32
      %c0_i32_80 = arith.constant 0 : i32
      %111 = tpu.memref_slice %arg5[%c6_i32_79, %c0_i32_80] : memref<8x128xf32, #tpu.memory_space<vmem>> -> memref<1x128xf32, #tpu.memory_space<vmem>>
      %112 = tpu.memref_slice %arg6[%c6_i32_77] : memref<8x!tpu.dma_semaphore, #tpu.memory_space<semaphore_mem>> -> memref<1x!tpu.dma_semaphore, #tpu.memory_space<semaphore_mem>>
      %113 = tpu.memref_squeeze %112 : memref<1x!tpu.dma_semaphore, #tpu.memory_space<semaphore_mem>> -> memref<!tpu.dma_semaphore, #tpu.memory_space<semaphore_mem>>
      tpu.enqueue_dma source(%110 : memref<1x128xf32, #tpu.memory_space<any>>) target(%111 : memref<1x128xf32, #tpu.memory_space<vmem>>) target_semaphore(%113 : memref<!tpu.dma_semaphore, #tpu.memory_space<semaphore_mem>>)
    } else {
    }
    %c32100_i32_25 = arith.constant 32100 : i32
    %61 = arith.cmpi slt, %57, %c32100_i32_25 : i32
    %62 = arith.extui %61 : i1 to i32
    %c0_i32_26 = arith.constant 0 : i32
    %63 = arith.cmpi ne, %62, %c0_i32_26 : i32
    scf.if %63 {
      %c0_i32_74 = arith.constant 0 : i32
      %c32099_i32 = arith.constant 32099 : i32
      %107 = arith.maxsi %c0_i32_74, %57 : i32
      %108 = arith.minsi %c32099_i32, %107 : i32
      %c6_i32_75 = arith.constant 6 : i32
      %c0_i32_76 = arith.constant 0 : i32
      %109 = tpu.memref_slice %arg2[%108, %c0_i32_76] : memref<32100x128xf32, #tpu.memory_space<any>> -> memref<1x128xf32, #tpu.memory_space<any>>
      %c6_i32_77 = arith.constant 6 : i32
      %c0_i32_78 = arith.constant 0 : i32
      %110 = tpu.memref_slice %arg5[%c6_i32_77, %c0_i32_78] : memref<8x128xf32, #tpu.memory_space<vmem>> -> memref<1x128xf32, #tpu.memory_space<vmem>>
      %111 = tpu.memref_slice %arg6[%c6_i32_75] : memref<8x!tpu.dma_semaphore, #tpu.memory_space<semaphore_mem>> -> memref<1x!tpu.dma_semaphore, #tpu.memory_space<semaphore_mem>>
      %112 = tpu.memref_squeeze %111 : memref<1x!tpu.dma_semaphore, #tpu.memory_space<semaphore_mem>> -> memref<!tpu.dma_semaphore, #tpu.memory_space<semaphore_mem>>
      tpu.enqueue_dma source(%109 : memref<1x128xf32, #tpu.memory_space<any>>) target(%110 : memref<1x128xf32, #tpu.memory_space<vmem>>) target_semaphore(%112 : memref<!tpu.dma_semaphore, #tpu.memory_space<semaphore_mem>>)
    } else {
    }
    %c7_i32 = arith.constant 7 : i32
    %64 = arith.addi %0, %c7_i32 : i32
    %65 = arith.index_cast %64 : i32 to index
    %66 = memref.load %arg1[%65] : memref<16xi32, #tpu.memory_space<smem>>
    %c32100_i32_27 = arith.constant 32100 : i32
    %67 = arith.cmpi sge, %66, %c32100_i32_27 : i32
    %68 = arith.extui %67 : i1 to i32
    %c0_i32_28 = arith.constant 0 : i32
    %69 = arith.cmpi ne, %68, %c0_i32_28 : i32
    scf.if %69 {
      %c32100_i32_74 = arith.constant 32100 : i32
      %107 = arith.subi %66, %c32100_i32_74 : i32
      %c0_i32_75 = arith.constant 0 : i32
      %c7_i32_76 = arith.constant 7 : i32
      %108 = arith.maxsi %c0_i32_75, %107 : i32
      %109 = arith.minsi %c7_i32_76, %108 : i32
      %c7_i32_77 = arith.constant 7 : i32
      %c0_i32_78 = arith.constant 0 : i32
      %110 = tpu.memref_slice %arg3[%109, %c0_i32_78] : memref<8x128xf32, #tpu.memory_space<any>> -> memref<1x128xf32, #tpu.memory_space<any>>
      %c7_i32_79 = arith.constant 7 : i32
      %c0_i32_80 = arith.constant 0 : i32
      %111 = tpu.memref_slice %arg5[%c7_i32_79, %c0_i32_80] : memref<8x128xf32, #tpu.memory_space<vmem>> -> memref<1x128xf32, #tpu.memory_space<vmem>>
      %112 = tpu.memref_slice %arg6[%c7_i32_77] : memref<8x!tpu.dma_semaphore, #tpu.memory_space<semaphore_mem>> -> memref<1x!tpu.dma_semaphore, #tpu.memory_space<semaphore_mem>>
      %113 = tpu.memref_squeeze %112 : memref<1x!tpu.dma_semaphore, #tpu.memory_space<semaphore_mem>> -> memref<!tpu.dma_semaphore, #tpu.memory_space<semaphore_mem>>
      tpu.enqueue_dma source(%110 : memref<1x128xf32, #tpu.memory_space<any>>) target(%111 : memref<1x128xf32, #tpu.memory_space<vmem>>) target_semaphore(%113 : memref<!tpu.dma_semaphore, #tpu.memory_space<semaphore_mem>>)
    } else {
    }
    %c32100_i32_29 = arith.constant 32100 : i32
    %70 = arith.cmpi slt, %66, %c32100_i32_29 : i32
    %71 = arith.extui %70 : i1 to i32
    %c0_i32_30 = arith.constant 0 : i32
    %72 = arith.cmpi ne, %71, %c0_i32_30 : i32
    scf.if %72 {
      %c0_i32_74 = arith.constant 0 : i32
      %c32099_i32 = arith.constant 32099 : i32
      %107 = arith.maxsi %c0_i32_74, %66 : i32
      %108 = arith.minsi %c32099_i32, %107 : i32
      %c7_i32_75 = arith.constant 7 : i32
      %c0_i32_76 = arith.constant 0 : i32
      %109 = tpu.memref_slice %arg2[%108, %c0_i32_76] : memref<32100x128xf32, #tpu.memory_space<any>> -> memref<1x128xf32, #tpu.memory_space<any>>
      %c7_i32_77 = arith.constant 7 : i32
      %c0_i32_78 = arith.constant 0 : i32
      %110 = tpu.memref_slice %arg5[%c7_i32_77, %c0_i32_78] : memref<8x128xf32, #tpu.memory_space<vmem>> -> memref<1x128xf32, #tpu.memory_space<vmem>>
      %111 = tpu.memref_slice %arg6[%c7_i32_75] : memref<8x!tpu.dma_semaphore, #tpu.memory_space<semaphore_mem>> -> memref<1x!tpu.dma_semaphore, #tpu.memory_space<semaphore_mem>>
      %112 = tpu.memref_squeeze %111 : memref<1x!tpu.dma_semaphore, #tpu.memory_space<semaphore_mem>> -> memref<!tpu.dma_semaphore, #tpu.memory_space<semaphore_mem>>
      tpu.enqueue_dma source(%109 : memref<1x128xf32, #tpu.memory_space<any>>) target(%110 : memref<1x128xf32, #tpu.memory_space<vmem>>) target_semaphore(%112 : memref<!tpu.dma_semaphore, #tpu.memory_space<semaphore_mem>>)
    } else {
    }
    %c0_i32_31 = arith.constant 0 : i32
    %c0_i32_32 = arith.constant 0 : i32
    %c0_i32_33 = arith.constant 0 : i32
    %73 = tpu.memref_slice %arg2[%c0_i32_32, %c0_i32_33] : memref<32100x128xf32, #tpu.memory_space<any>> -> memref<1x128xf32, #tpu.memory_space<any>>
    %c0_i32_34 = arith.constant 0 : i32
    %c0_i32_35 = arith.constant 0 : i32
    %74 = tpu.memref_slice %arg5[%c0_i32_34, %c0_i32_35] : memref<8x128xf32, #tpu.memory_space<vmem>> -> memref<1x128xf32, #tpu.memory_space<vmem>>
    %75 = tpu.memref_slice %arg6[%c0_i32_31] : memref<8x!tpu.dma_semaphore, #tpu.memory_space<semaphore_mem>> -> memref<1x!tpu.dma_semaphore, #tpu.memory_space<semaphore_mem>>
    %76 = tpu.memref_squeeze %75 : memref<1x!tpu.dma_semaphore, #tpu.memory_space<semaphore_mem>> -> memref<!tpu.dma_semaphore, #tpu.memory_space<semaphore_mem>>
    tpu.wait_dma2 semaphore(%76 : memref<!tpu.dma_semaphore, #tpu.memory_space<semaphore_mem>>) src(%73 : memref<1x128xf32, #tpu.memory_space<any>>) dst(%74 : memref<1x128xf32, #tpu.memory_space<vmem>>)
    %c1_i32_36 = arith.constant 1 : i32
    %c0_i32_37 = arith.constant 0 : i32
    %c0_i32_38 = arith.constant 0 : i32
    %77 = tpu.memref_slice %arg2[%c0_i32_37, %c0_i32_38] : memref<32100x128xf32, #tpu.memory_space<any>> -> memref<1x128xf32, #tpu.memory_space<any>>
    %c1_i32_39 = arith.constant 1 : i32
    %c0_i32_40 = arith.constant 0 : i32
    %78 = tpu.memref_slice %arg5[%c1_i32_39, %c0_i32_40] : memref<8x128xf32, #tpu.memory_space<vmem>> -> memref<1x128xf32, #tpu.memory_space<vmem>>
    %79 = tpu.memref_slice %arg6[%c1_i32_36] : memref<8x!tpu.dma_semaphore, #tpu.memory_space<semaphore_mem>> -> memref<1x!tpu.dma_semaphore, #tpu.memory_space<semaphore_mem>>
    %80 = tpu.memref_squeeze %79 : memref<1x!tpu.dma_semaphore, #tpu.memory_space<semaphore_mem>> -> memref<!tpu.dma_semaphore, #tpu.memory_space<semaphore_mem>>
    tpu.wait_dma2 semaphore(%80 : memref<!tpu.dma_semaphore, #tpu.memory_space<semaphore_mem>>) src(%77 : memref<1x128xf32, #tpu.memory_space<any>>) dst(%78 : memref<1x128xf32, #tpu.memory_space<vmem>>)
    %c2_i32_41 = arith.constant 2 : i32
    %c0_i32_42 = arith.constant 0 : i32
    %c0_i32_43 = arith.constant 0 : i32
    %81 = tpu.memref_slice %arg2[%c0_i32_42, %c0_i32_43] : memref<32100x128xf32, #tpu.memory_space<any>> -> memref<1x128xf32, #tpu.memory_space<any>>
    %c2_i32_44 = arith.constant 2 : i32
    %c0_i32_45 = arith.constant 0 : i32
    %82 = tpu.memref_slice %arg5[%c2_i32_44, %c0_i32_45] : memref<8x128xf32, #tpu.memory_space<vmem>> -> memref<1x128xf32, #tpu.memory_space<vmem>>
    %83 = tpu.memref_slice %arg6[%c2_i32_41] : memref<8x!tpu.dma_semaphore, #tpu.memory_space<semaphore_mem>> -> memref<1x!tpu.dma_semaphore, #tpu.memory_space<semaphore_mem>>
    %84 = tpu.memref_squeeze %83 : memref<1x!tpu.dma_semaphore, #tpu.memory_space<semaphore_mem>> -> memref<!tpu.dma_semaphore, #tpu.memory_space<semaphore_mem>>
    tpu.wait_dma2 semaphore(%84 : memref<!tpu.dma_semaphore, #tpu.memory_space<semaphore_mem>>) src(%81 : memref<1x128xf32, #tpu.memory_space<any>>) dst(%82 : memref<1x128xf32, #tpu.memory_space<vmem>>)
    %c3_i32_46 = arith.constant 3 : i32
    %c0_i32_47 = arith.constant 0 : i32
    %c0_i32_48 = arith.constant 0 : i32
    %85 = tpu.memref_slice %arg2[%c0_i32_47, %c0_i32_48] : memref<32100x128xf32, #tpu.memory_space<any>> -> memref<1x128xf32, #tpu.memory_space<any>>
    %c3_i32_49 = arith.constant 3 : i32
    %c0_i32_50 = arith.constant 0 : i32
    %86 = tpu.memref_slice %arg5[%c3_i32_49, %c0_i32_50] : memref<8x128xf32, #tpu.memory_space<vmem>> -> memref<1x128xf32, #tpu.memory_space<vmem>>
    %87 = tpu.memref_slice %arg6[%c3_i32_46] : memref<8x!tpu.dma_semaphore, #tpu.memory_space<semaphore_mem>> -> memref<1x!tpu.dma_semaphore, #tpu.memory_space<semaphore_mem>>
    %88 = tpu.memref_squeeze %87 : memref<1x!tpu.dma_semaphore, #tpu.memory_space<semaphore_mem>> -> memref<!tpu.dma_semaphore, #tpu.memory_space<semaphore_mem>>
    tpu.wait_dma2 semaphore(%88 : memref<!tpu.dma_semaphore, #tpu.memory_space<semaphore_mem>>) src(%85 : memref<1x128xf32, #tpu.memory_space<any>>) dst(%86 : memref<1x128xf32, #tpu.memory_space<vmem>>)
    %c4_i32_51 = arith.constant 4 : i32
    %c0_i32_52 = arith.constant 0 : i32
    %c0_i32_53 = arith.constant 0 : i32
    %89 = tpu.memref_slice %arg2[%c0_i32_52, %c0_i32_53] : memref<32100x128xf32, #tpu.memory_space<any>> -> memref<1x128xf32, #tpu.memory_space<any>>
    %c4_i32_54 = arith.constant 4 : i32
    %c0_i32_55 = arith.constant 0 : i32
    %90 = tpu.memref_slice %arg5[%c4_i32_54, %c0_i32_55] : memref<8x128xf32, #tpu.memory_space<vmem>> -> memref<1x128xf32, #tpu.memory_space<vmem>>
    %91 = tpu.memref_slice %arg6[%c4_i32_51] : memref<8x!tpu.dma_semaphore, #tpu.memory_space<semaphore_mem>> -> memref<1x!tpu.dma_semaphore, #tpu.memory_space<semaphore_mem>>
    %92 = tpu.memref_squeeze %91 : memref<1x!tpu.dma_semaphore, #tpu.memory_space<semaphore_mem>> -> memref<!tpu.dma_semaphore, #tpu.memory_space<semaphore_mem>>
    tpu.wait_dma2 semaphore(%92 : memref<!tpu.dma_semaphore, #tpu.memory_space<semaphore_mem>>) src(%89 : memref<1x128xf32, #tpu.memory_space<any>>) dst(%90 : memref<1x128xf32, #tpu.memory_space<vmem>>)
    %c5_i32_56 = arith.constant 5 : i32
    %c0_i32_57 = arith.constant 0 : i32
    %c0_i32_58 = arith.constant 0 : i32
    %93 = tpu.memref_slice %arg2[%c0_i32_57, %c0_i32_58] : memref<32100x128xf32, #tpu.memory_space<any>> -> memref<1x128xf32, #tpu.memory_space<any>>
    %c5_i32_59 = arith.constant 5 : i32
    %c0_i32_60 = arith.constant 0 : i32
    %94 = tpu.memref_slice %arg5[%c5_i32_59, %c0_i32_60] : memref<8x128xf32, #tpu.memory_space<vmem>> -> memref<1x128xf32, #tpu.memory_space<vmem>>
    %95 = tpu.memref_slice %arg6[%c5_i32_56] : memref<8x!tpu.dma_semaphore, #tpu.memory_space<semaphore_mem>> -> memref<1x!tpu.dma_semaphore, #tpu.memory_space<semaphore_mem>>
    %96 = tpu.memref_squeeze %95 : memref<1x!tpu.dma_semaphore, #tpu.memory_space<semaphore_mem>> -> memref<!tpu.dma_semaphore, #tpu.memory_space<semaphore_mem>>
    tpu.wait_dma2 semaphore(%96 : memref<!tpu.dma_semaphore, #tpu.memory_space<semaphore_mem>>) src(%93 : memref<1x128xf32, #tpu.memory_space<any>>) dst(%94 : memref<1x128xf32, #tpu.memory_space<vmem>>)
    %c6_i32_61 = arith.constant 6 : i32
    %c0_i32_62 = arith.constant 0 : i32
    %c0_i32_63 = arith.constant 0 : i32
    %97 = tpu.memref_slice %arg2[%c0_i32_62, %c0_i32_63] : memref<32100x128xf32, #tpu.memory_space<any>> -> memref<1x128xf32, #tpu.memory_space<any>>
    %c6_i32_64 = arith.constant 6 : i32
    %c0_i32_65 = arith.constant 0 : i32
    %98 = tpu.memref_slice %arg5[%c6_i32_64, %c0_i32_65] : memref<8x128xf32, #tpu.memory_space<vmem>> -> memref<1x128xf32, #tpu.memory_space<vmem>>
    %99 = tpu.memref_slice %arg6[%c6_i32_61] : memref<8x!tpu.dma_semaphore, #tpu.memory_space<semaphore_mem>> -> memref<1x!tpu.dma_semaphore, #tpu.memory_space<semaphore_mem>>
    %100 = tpu.memref_squeeze %99 : memref<1x!tpu.dma_semaphore, #tpu.memory_space<semaphore_mem>> -> memref<!tpu.dma_semaphore, #tpu.memory_space<semaphore_mem>>
    tpu.wait_dma2 semaphore(%100 : memref<!tpu.dma_semaphore, #tpu.memory_space<semaphore_mem>>) src(%97 : memref<1x128xf32, #tpu.memory_space<any>>) dst(%98 : memref<1x128xf32, #tpu.memory_space<vmem>>)
    %c7_i32_66 = arith.constant 7 : i32
    %c0_i32_67 = arith.constant 0 : i32
    %c0_i32_68 = arith.constant 0 : i32
    %101 = tpu.memref_slice %arg2[%c0_i32_67, %c0_i32_68] : memref<32100x128xf32, #tpu.memory_space<any>> -> memref<1x128xf32, #tpu.memory_space<any>>
    %c7_i32_69 = arith.constant 7 : i32
    %c0_i32_70 = arith.constant 0 : i32
    %102 = tpu.memref_slice %arg5[%c7_i32_69, %c0_i32_70] : memref<8x128xf32, #tpu.memory_space<vmem>> -> memref<1x128xf32, #tpu.memory_space<vmem>>
    %103 = tpu.memref_slice %arg6[%c7_i32_66] : memref<8x!tpu.dma_semaphore, #tpu.memory_space<semaphore_mem>> -> memref<1x!tpu.dma_semaphore, #tpu.memory_space<semaphore_mem>>
    %104 = tpu.memref_squeeze %103 : memref<1x!tpu.dma_semaphore, #tpu.memory_space<semaphore_mem>> -> memref<!tpu.dma_semaphore, #tpu.memory_space<semaphore_mem>>
    tpu.wait_dma2 semaphore(%104 : memref<!tpu.dma_semaphore, #tpu.memory_space<semaphore_mem>>) src(%101 : memref<1x128xf32, #tpu.memory_space<any>>) dst(%102 : memref<1x128xf32, #tpu.memory_space<vmem>>)
    %c0 = arith.constant 0 : index
    %c0_71 = arith.constant 0 : index
    %105 = vector.load %arg5[%c0, %c0_71] : memref<8x128xf32, #tpu.memory_space<vmem>>, vector<8x128xf32>
    %c0_72 = arith.constant 0 : index
    %c0_73 = arith.constant 0 : index
    %106 = vector.load %arg4[%c0_72, %c0_73] : memref<8x128xf32, #tpu.memory_space<vmem>>, vector<8x128xf32>
    tpu.vector_store %arg4[%c0_72, %c0_73], %105 {strides = array<i32>} : memref<8x128xf32, #tpu.memory_space<vmem>>, vector<8x128xf32>,
    return
  }
  func.func @transform_2(%arg0: i32, %arg1: memref<16xi32, #tpu.memory_space<smem>>) -> (i32, i32) {
    %c0_i32 = arith.constant 0 : i32
    %c0_i32_0 = arith.constant 0 : i32
    return %arg0, %c0_i32 : i32, i32
  }
}

</mosaic_0001>

<llo_original>
// kernel: tpu_custom_call.1
$region0: #{tpu_custom_call.1}
  #allocation0 [shape = 'u32[]', space=smem, size = 0x4, offset = 0x4, fixed_abs, tag = 'smem constant byte address 0x4 - core index']
  #allocation1 [shape = 'u32[144,128]{1,0:T(1,128)}', space=vmem, size = 0x12000, scoped, tag = 'internal scratch']
  #allocation2 [shape = 'f32[8,128]{1,0:T(8,128)}', space=vmem, size = 0x1000, scoped, tag = 'scratch operand']
  #allocation3 [shape = 's32[8]{0}', space=sflag, size = 0x20, scoped, tag = 'scratch operand']
  #allocation4 [shape = 's32[1]{0}', space=sflag, size = 0x4, scoped, tag = 'scoped memory for tpu_custom_call.1']
  #allocation5 [shape = 'u8[512]{0}', space=smem, size = 0x200, scoped, tag = 'prefetched SMEM operand 0']
  #allocation8 [shape = 's32[]', space=sflag, size = 0x4, offset = 0, fixed_abs, tag = 'sflag constant byte address 0x0 - dummy sync flag']
  #allocation9 [shape = 's32[]', space=sflag, size = 0x4, offset = 0, fixed_abs, tag = 'sflag constant byte address 0x0 - dummy sync flag']
  #allocation10 [shape = 'u32[]', space=smem, size = 0x4, offset = 0x44, fixed_abs, tag = 'smem constant byte address 0x44 - assertion arg 0']
  #allocation11 [shape = 'u32[]', space=smem, size = 0x4, offset = 0x48, fixed_abs, tag = 'smem constant byte address 0x48 - assertion arg 1']
  #allocation12 [shape = 's32[]', space=sflag, size = 0x4, offset = 0, fixed_abs, tag = 'sflag constant byte address 0x0 - dummy sync flag']
  #allocation13 [shape = 's32[]', space=sflag, size = 0x4, offset = 0, fixed_abs, tag = 'sflag constant byte address 0x0 - dummy sync flag']
  #allocation14 [shape = 's32[]', space=sflag, size = 0x4, offset = 0, fixed_abs, tag = 'sflag constant byte address 0x0 - dummy sync flag']
  #allocation15 [shape = 's32[]', space=sflag, size = 0x4, offset = 0, fixed_abs, tag = 'sflag constant byte address 0x0 - dummy sync flag']
  #allocation16 [shape = 's32[]', space=sflag, size = 0x4, offset = 0, fixed_abs, tag = 'sflag constant byte address 0x0 - dummy sync flag']
  #allocation17 [shape = 's32[]', space=sflag, size = 0x4, offset = 0, fixed_abs, tag = 'sflag constant byte address 0x0 - dummy sync flag']
  #allocation18 [shape = 's32[]', space=sflag, size = 0x4, offset = 0, fixed_abs, tag = 'sflag constant byte address 0x0 - dummy sync flag']
  #allocation19 [shape = 's32[]', space=sflag, size = 0x4, offset = 0, fixed_abs, tag = 'sflag constant byte address 0x0 - dummy sync flag']
  #allocation20 [shape = 's32[]', space=sflag, size = 0x4, offset = 0, fixed_abs, tag = 'sflag constant byte address 0x0 - dummy sync flag']
  #allocation21 [shape = 's32[]', space=sflag, size = 0x4, offset = 0, fixed_abs, tag = 'sflag constant byte address 0x0 - dummy sync flag']
  #allocation22 [shape = 's32[]', space=sflag, size = 0x4, offset = 0, fixed_abs, tag = 'sflag constant byte address 0x0 - dummy sync flag']
  #allocation23 [shape = 's32[]', space=sflag, size = 0x4, offset = 0, fixed_abs, tag = 'sflag constant byte address 0x0 - dummy sync flag']
  #allocation24 [shape = 's32[]', space=sflag, size = 0x4, offset = 0, fixed_abs, tag = 'sflag constant byte address 0x0 - dummy sync flag']
  #allocation25 [shape = 's32[]', space=sflag, size = 0x4, offset = 0, fixed_abs, tag = 'sflag constant byte address 0x0 - dummy sync flag']
  #allocation26 [shape = 's32[]', space=sflag, size = 0x4, offset = 0, fixed_abs, tag = 'sflag constant byte address 0x0 - dummy sync flag']
  #allocation27 [shape = 's32[]', space=sflag, size = 0x4, offset = 0, fixed_abs, tag = 'sflag constant byte address 0x0 - dummy sync flag']
  #allocation28 [shape = 's32[]', space=sflag, size = 0x4, offset = 0, fixed_abs, tag = 'sflag constant byte address 0x0 - dummy sync flag']
  #allocation29 [shape = 's32[]', space=sflag, size = 0x4, offset = 0, fixed_abs, tag = 'sflag constant byte address 0x0 - dummy sync flag']
  #allocation30 [shape = 's32[]', space=sflag, size = 0x4, offset = 0, fixed_abs, tag = 'sflag constant byte address 0x0 - dummy sync flag']
  #allocation31 [shape = 's32[]', space=sflag, size = 0x4, offset = 0, fixed_abs, tag = 'sflag constant byte address 0x0 - dummy sync flag']
  #allocation32 [shape = 's32[]', space=sflag, size = 0x4, offset = 0, fixed_abs, tag = 'sflag constant byte address 0x0 - dummy sync flag']
  #allocation33 [shape = 's32[]', space=sflag, size = 0x4, offset = 0, fixed_abs, tag = 'sflag constant byte address 0x0 - dummy sync flag']
  #allocation34 [shape = 's32[]', space=sflag, size = 0x4, offset = 0, fixed_abs, tag = 'sflag constant byte address 0x0 - dummy sync flag']
  #allocation35 [shape = 's32[]', space=sflag, size = 0x4, offset = 0, fixed_abs, tag = 'sflag constant byte address 0x0 - dummy sync flag']
  #allocation36 [shape = 's32[]', space=sflag, size = 0x4, offset = 0, fixed_abs, tag = 'sflag constant byte address 0x0 - dummy sync flag']
  #allocation37 [shape = 's32[]', space=sflag, size = 0x4, offset = 0, fixed_abs, tag = 'sflag constant byte address 0x0 - dummy sync flag']
  #allocation38 [shape = 's32[]', space=sflag, size = 0x4, offset = 0, fixed_abs, tag = 'sflag constant byte address 0x0 - dummy sync flag']
  #allocation39 [shape = 's32[]', space=sflag, size = 0x4, offset = 0, fixed_abs, tag = 'sflag constant byte address 0x0 - dummy sync flag']
  #allocation40 [shape = 's32[]', space=sflag, size = 0x4, offset = 0, fixed_abs, tag = 'sflag constant byte address 0x0 - dummy sync flag']
  #allocation41 [shape = 's32[]', space=sflag, size = 0x4, offset = 0, fixed_abs, tag = 'sflag constant byte address 0x0 - dummy sync flag']
  %s0 = inlined_call_operand.hbm [shape: s32[16], index: 0, kind: input, shape index: {}]
  %s1 = inlined_call_operand.hbm [shape: f32[32100,128], index: 1, kind: input, shape index: {}]
  %s2 = inlined_call_operand.hbm [shape: f32[8,128], index: 2, kind: input, shape index: {}]
  %s3 = inlined_call_operand.hbm [shape: f32[16,128], index: 3, kind: output, shape index: {}]
  %s4 = sld [smem:[#allocation0]]
  $region153: #{tpu_custom_call.1} parent=0
    _
  %s6 = ssub.s32 1, %s4
  %s7 = scalar_select 0, %s6, %s4
  %9 = dma.hbm_to_smem %s0, 16, [#allocation5], [#allocation4]
  %10 = dma.done [#allocation4], 16
  %11 = sfence
  $region1: #{tpu_custom_call.1} parent=0
    #allocation6 [shape = 'u8[8192]{0}', space=vmem, size = 0x2000, scoped, tag = 'output window, operand 0']
    #allocation7 [shape = 's32[2]{0}', space=sflag, size = 0x8, scoped, tag = 'scoped memory for tpu_custom_call.1']
    %12 = vsyncpa [#allocation7], 0
    %s13 = scalar_lea.sflag [#allocation7], 1
    %14 = vsyncpa %s13, 0
    loop: start=0, step=1, limit=3
    $region2: #{tpu_custom_call.1} parent=1 // loop_pre_header
      _
    $region3: #{tpu_custom_call.1} parent=1 // loop_header
      %s16 = sphi 0, %s20
      %p17 = scmp.ge.s32.totalorder %s16, 3
      %s25 = sphi 0, %s27
      %s28 = sphi 0, %s25
      %s38 = sphi 0, %s28
    $region4: #{tpu_custom_call.1} parent=1 // loop_header_branch
      %19 = sbr.rel (%p17) target = $region8
    $region5: #{tpu_custom_call.1} parent=1 // loop_body
      %s21 = ssub.s32 %s16, 1
      %s22 = sadd.s32 %s16, 1
      %s23 = ssub.s32 %s16, %s22
      %p24 = scmp.eq.s32.totalorder %s23, 0
      %s26 = sadd.s32 %s25, 1
      %s27 = scalar_select %p24, %s25, %s26
      %p29 = pneg %p24
      %p30 = scmp.eq.s32.totalorder %s16, 1
      %p31 = por %p29, %p30
      %p32 = scmp.ne.s32.totalorder %s25, %s28
      %p33 = scmp.eq.s32.totalorder %s16, 0
      %p34 = por %p32, %p33
      %p35 = scmp.ne.s32.totalorder %s25, %s28
      %p36 = scmp.eq.s32.totalorder %s21, 1
      %p37 = por %p35, %p36
      %p39 = scmp.ne.s32.totalorder %s28, %s38
      %p40 = scmp.eq.s32.totalorder %s21, 0
      %p41 = por %p39, %p40
      %p42 = scmp.lt.s32.totalorder %s16, 2
      // Predicated region
      $region9: #{tpu_custom_call.1} parent=5 // pred_check
        %p43 = pneg %p42
      $region10: #{tpu_custom_call.1} parent=5 // pred_check_branch
        %45 = sbr.rel (%p43) target = $region12
      $region11: #{tpu_custom_call.1} parent=5 // pred_region
        %p46 = pneg %p34
        %p47 = pneg %p31
        %s48 = sand.u32 %s25, 1
        %s49 = scalar_lea.sflag [#allocation7], %s48
        %s50 = sand.u32 %s25, 1
        %s51 = smul.addr %s50, 8
        %s52 = scalar_lea.vmem [#allocation6], %s51
        %s53 = smul.u32 %s16, 8
        %s54 = sld [smem:[#allocation5 + %s53]]
        %p55 = scmp.ge.s32.totalorder %s54, 32100
        // Predicated region
        $region13: #{tpu_custom_call.1} parent=11 // pred_check
          %p56 = pneg %p55
        $region14: #{tpu_custom_call.1} parent=11 // pred_check_branch
          %58 = sbr.rel (%p56) target = $region16
        $region15: #{tpu_custom_call.1} parent=11 // pred_region
          %s59 = ssub.s32 %s54, 32100
          %p60 = scmp.gt.s32.totalorder %s59, 0
          %s61 = scalar_select %p60, %s59, 0
          %p62 = scmp.lt.s32.totalorder %s61, 7
          %s63 = scalar_select %p62, %s61, 7
          %s64 = smul.addr %s63, 16
          %s65 = scalar_lea.hbm %s2, %s64
          // Predicated region
          $region17: #{tpu_custom_call.1} parent=15 // pred_check
            _
          $region18: #{tpu_custom_call.1} parent=15 // pred_check_branch
            %67 = sbr.rel target = $region20
          $region19: #{tpu_custom_call.1} parent=15 // pred_region
            %68 = sst [smem:[#allocation10]] [#allocation9]
            %69 = sst [smem:[#allocation11]] [#allocation8]
          $region20: #{tpu_custom_call.1} parent=15 // pred_fallthru
            _
          %71 = shalt.err (0)
          %s73 = sshll.u32 [#allocation2], 4
          %s74 = int_to_ptr.vmem [resolvable:$true] %s73
          %76 = dma.hbm_to_vmem [thread:$0]  %s65, 16, %s74, [#allocation3]
        $region16: #{tpu_custom_call.1} parent=11 // pred_fallthru
          _
        %p77 = scmp.lt.s32.totalorder %s54, 32100
        // Predicated region
        $region21: #{tpu_custom_call.1} parent=11 // pred_check
          %p78 = pneg %p77
        $region22: #{tpu_custom_call.1} parent=11 // pred_check_branch
          %80 = sbr.rel (%p78) target = $region24
        $region23: #{tpu_custom_call.1} parent=11 // pred_region
          %p81 = scmp.gt.s32.totalorder %s54, 0
          %s82 = scalar_select %p81, %s54, 0
          %p83 = scmp.lt.s32.totalorder %s82, 32099
          %s84 = scalar_select %p83, %s82, 32099
          %s85 = smul.addr %s84, 16
          %s86 = scalar_lea.hbm %s1, %s85
          // Predicated region
          $region25: #{tpu_custom_call.1} parent=23 // pred_check
            _
          $region26: #{tpu_custom_call.1} parent=23 // pred_check_branch
            %88 = sbr.rel target = $region28
          $region27: #{tpu_custom_call.1} parent=23 // pred_region
            %89 = sst [smem:[#allocation10]] [#allocation13]
            %90 = sst [smem:[#allocation11]] [#allocation12]
          $region28: #{tpu_custom_call.1} parent=23 // pred_fallthru
            _
          %92 = shalt.err (0)
          %s94 = sshll.u32 [#allocation2], 4
          %s95 = int_to_ptr.vmem [resolvable:$true] %s94
          %97 = dma.hbm_to_vmem [thread:$0]  %s86, 16, %s95, [#allocation3]
        $region24: #{tpu_custom_call.1} parent=11 // pred_fallthru
          _
        %s98 = sadd.s32 %s53, 1
        %s99 = sld [smem:[#allocation5 + %s98]]
        %p100 = scmp.ge.s32.totalorder %s99, 32100
        // Predicated region
        $region29: #{tpu_custom_call.1} parent=11 // pred_check
          %p101 = pneg %p100
        $region30: #{tpu_custom_call.1} parent=11 // pred_check_branch
          %103 = sbr.rel (%p101) target = $region32
        $region31: #{tpu_custom_call.1} parent=11 // pred_region
          %s104 = ssub.s32 %s99, 32100
          %p105 = scmp.gt.s32.totalorder %s104, 0
          %s106 = scalar_select %p105, %s104, 0
          %p107 = scmp.lt.s32.totalorder %s106, 7
          %s108 = scalar_select %p107, %s106, 7
          %s109 = smul.addr %s108, 16
          %s110 = scalar_lea.hbm %s2, %s109
          %s111 = scalar_lea.vmem [#allocation2], 1
          %s112 = scalar_lea.sflag [#allocation3], 1
          // Predicated region
          $region33: #{tpu_custom_call.1} parent=31 // pred_check
            _
          $region34: #{tpu_custom_call.1} parent=31 // pred_check_branch
            %114 = sbr.rel target = $region36
          $region35: #{tpu_custom_call.1} parent=31 // pred_region
            %115 = sst [smem:[#allocation10]] [#allocation15]
            %116 = sst [smem:[#allocation11]] [#allocation14]
          $region36: #{tpu_custom_call.1} parent=31 // pred_fallthru
            _
          %118 = shalt.err (0)
          %s120 = sshll.u32 %s111, 4
          %s121 = int_to_ptr.vmem [resolvable:$true] %s120
          %123 = dma.hbm_to_vmem [thread:$0]  %s110, 16, %s121, %s112
        $region32: #{tpu_custom_call.1} parent=11 // pred_fallthru
          _
        %p124 = scmp.lt.s32.totalorder %s99, 32100
        // Predicated region
        $region37: #{tpu_custom_call.1} parent=11 // pred_check
          %p125 = pneg %p124
        $region38: #{tpu_custom_call.1} parent=11 // pred_check_branch
          %127 = sbr.rel (%p125) target = $region40
        $region39: #{tpu_custom_call.1} parent=11 // pred_region
          %p128 = scmp.gt.s32.totalorder %s99, 0
          %s129 = scalar_select %p128, %s99, 0
          %p130 = scmp.lt.s32.totalorder %s129, 32099
          %s131 = scalar_select %p130, %s129, 32099
          %s132 = smul.addr %s131, 16
          %s133 = scalar_lea.hbm %s1, %s132
          %s134 = scalar_lea.vmem [#allocation2], 1
          %s135 = scalar_lea.sflag [#allocation3], 1
          // Predicated region
          $region41: #{tpu_custom_call.1} parent=39 // pred_check
            _
          $region42: #{tpu_custom_call.1} parent=39 // pred_check_branch
            %137 = sbr.rel target = $region44
          $region43: #{tpu_custom_call.1} parent=39 // pred_region
            %138 = sst [smem:[#allocation10]] [#allocation17]
            %139 = sst [smem:[#allocation11]] [#allocation16]
          $region44: #{tpu_custom_call.1} parent=39 // pred_fallthru
            _
          %141 = shalt.err (0)
          %s143 = sshll.u32 %s134, 4
          %s144 = int_to_ptr.vmem [resolvable:$true] %s143
          %146 = dma.hbm_to_vmem [thread:$0]  %s133, 16, %s144, %s135
        $region40: #{tpu_custom_call.1} parent=11 // pred_fallthru
          _
        %s147 = sadd.s32 %s53, 2
        %s148 = sld [smem:[#allocation5 + %s147]]
        %p149 = scmp.ge.s32.totalorder %s148, 32100
        // Predicated region
        $region45: #{tpu_custom_call.1} parent=11 // pred_check
          %p150 = pneg %p149
        $region46: #{tpu_custom_call.1} parent=11 // pred_check_branch
          %152 = sbr.rel (%p150) target = $region48
        $region47: #{tpu_custom_call.1} parent=11 // pred_region
          %s153 = ssub.s32 %s148, 32100
          %p154 = scmp.gt.s32.totalorder %s153, 0
          %s155 = scalar_select %p154, %s153, 0
          %p156 = scmp.lt.s32.totalorder %s155, 7
          %s157 = scalar_select %p156, %s155, 7
          %s158 = smul.addr %s157, 16
          %s159 = scalar_lea.hbm %s2, %s158
          %s160 = scalar_lea.vmem [#allocation2], 2
          %s161 = scalar_lea.sflag [#allocation3], 2
          // Predicated region
          $region49: #{tpu_custom_call.1} parent=47 // pred_check
            _
          $region50: #{tpu_custom_call.1} parent=47 // pred_check_branch
            %163 = sbr.rel target = $region52
          $region51: #{tpu_custom_call.1} parent=47 // pred_region
            %164 = sst [smem:[#allocation10]] [#allocation19]
            %165 = sst [smem:[#allocation11]] [#allocation18]
          $region52: #{tpu_custom_call.1} parent=47 // pred_fallthru
            _
          %167 = shalt.err (0)
          %s169 = sshll.u32 %s160, 4
          %s170 = int_to_ptr.vmem [resolvable:$true] %s169
          %172 = dma.hbm_to_vmem [thread:$0]  %s159, 16, %s170, %s161
        $region48: #{tpu_custom_call.1} parent=11 // pred_fallthru
          _
        %p173 = scmp.lt.s32.totalorder %s148, 32100
        // Predicated region
        $region53: #{tpu_custom_call.1} parent=11 // pred_check
          %p174 = pneg %p173
        $region54: #{tpu_custom_call.1} parent=11 // pred_check_branch
          %176 = sbr.rel (%p174) target = $region56
        $region55: #{tpu_custom_call.1} parent=11 // pred_region
          %p177 = scmp.gt.s32.totalorder %s148, 0
          %s178 = scalar_select %p177, %s148, 0
          %p179 = scmp.lt.s32.totalorder %s178, 32099
          %s180 = scalar_select %p179, %s178, 32099
          %s181 = smul.addr %s180, 16
          %s182 = scalar_lea.hbm %s1, %s181
          %s183 = scalar_lea.vmem [#allocation2], 2
          %s184 = scalar_lea.sflag [#allocation3], 2
          // Predicated region
          $region57: #{tpu_custom_call.1} parent=55 // pred_check
            _
          $region58: #{tpu_custom_call.1} parent=55 // pred_check_branch
            %186 = sbr.rel target = $region60
          $region59: #{tpu_custom_call.1} parent=55 // pred_region
            %187 = sst [smem:[#allocation10]] [#allocation21]
            %188 = sst [smem:[#allocation11]] [#allocation20]
          $region60: #{tpu_custom_call.1} parent=55 // pred_fallthru
            _
          %190 = shalt.err (0)
          %s192 = sshll.u32 %s183, 4
          %s193 = int_to_ptr.vmem [resolvable:$true] %s192
          %195 = dma.hbm_to_vmem [thread:$0]  %s182, 16, %s193, %s184
        $region56: #{tpu_custom_call.1} parent=11 // pred_fallthru
          _
        %s196 = sadd.s32 %s53, 3
        %s197 = sld [smem:[#allocation5 + %s196]]
        %p198 = scmp.ge.s32.totalorder %s197, 32100
        // Predicated region
        $region61: #{tpu_custom_call.1} parent=11 // pred_check
          %p199 = pneg %p198
        $region62: #{tpu_custom_call.1} parent=11 // pred_check_branch
          %201 = sbr.rel (%p199) target = $region64
        $region63: #{tpu_custom_call.1} parent=11 // pred_region
          %s202 = ssub.s32 %s197, 32100
          %p203 = scmp.gt.s32.totalorder %s202, 0
          %s204 = scalar_select %p203, %s202, 0
          %p205 = scmp.lt.s32.totalorder %s204, 7
          %s206 = scalar_select %p205, %s204, 7
          %s207 = smul.addr %s206, 16
          %s208 = scalar_lea.hbm %s2, %s207
          %s209 = scalar_lea.vmem [#allocation2], 3
          %s210 = scalar_lea.sflag [#allocation3], 3
          // Predicated region
          $region65: #{tpu_custom_call.1} parent=63 // pred_check
            _
          $region66: #{tpu_custom_call.1} parent=63 // pred_check_branch
            %212 = sbr.rel target = $region68
          $region67: #{tpu_custom_call.1} parent=63 // pred_region
            %213 = sst [smem:[#allocation10]] [#allocation23]
            %214 = sst [smem:[#allocation11]] [#allocation22]
          $region68: #{tpu_custom_call.1} parent=63 // pred_fallthru
            _
          %216 = shalt.err (0)
          %s218 = sshll.u32 %s209, 4
          %s219 = int_to_ptr.vmem [resolvable:$true] %s218
          %221 = dma.hbm_to_vmem [thread:$0]  %s208, 16, %s219, %s210
        $region64: #{tpu_custom_call.1} parent=11 // pred_fallthru
          _
        %p222 = scmp.lt.s32.totalorder %s197, 32100
        // Predicated region
        $region69: #{tpu_custom_call.1} parent=11 // pred_check
          %p223 = pneg %p222
        $region70: #{tpu_custom_call.1} parent=11 // pred_check_branch
          %225 = sbr.rel (%p223) target = $region72
        $region71: #{tpu_custom_call.1} parent=11 // pred_region
          %p226 = scmp.gt.s32.totalorder %s197, 0
          %s227 = scalar_select %p226, %s197, 0
          %p228 = scmp.lt.s32.totalorder %s227, 32099
          %s229 = scalar_select %p228, %s227, 32099
          %s230 = smul.addr %s229, 16
          %s231 = scalar_lea.hbm %s1, %s230
          %s232 = scalar_lea.vmem [#allocation2], 3
          %s233 = scalar_lea.sflag [#allocation3], 3
          // Predicated region
          $region73: #{tpu_custom_call.1} parent=71 // pred_check
            _
          $region74: #{tpu_custom_call.1} parent=71 // pred_check_branch
            %235 = sbr.rel target = $region76
          $region75: #{tpu_custom_call.1} parent=71 // pred_region
            %236 = sst [smem:[#allocation10]] [#allocation25]
            %237 = sst [smem:[#allocation11]] [#allocation24]
          $region76: #{tpu_custom_call.1} parent=71 // pred_fallthru
            _
          %239 = shalt.err (0)
          %s241 = sshll.u32 %s232, 4
          %s242 = int_to_ptr.vmem [resolvable:$true] %s241
          %244 = dma.hbm_to_vmem [thread:$0]  %s231, 16, %s242, %s233
        $region72: #{tpu_custom_call.1} parent=11 // pred_fallthru
          _
        %s245 = sadd.s32 %s53, 4
        %s246 = sld [smem:[#allocation5 + %s245]]
        %p247 = scmp.ge.s32.totalorder %s246, 32100
        // Predicated region
        $region77: #{tpu_custom_call.1} parent=11 // pred_check
          %p248 = pneg %p247
        $region78: #{tpu_custom_call.1} parent=11 // pred_check_branch
          %250 = sbr.rel (%p248) target = $region80
        $region79: #{tpu_custom_call.1} parent=11 // pred_region
          %s251 = ssub.s32 %s246, 32100
          %p252 = scmp.gt.s32.totalorder %s251, 0
          %s253 = scalar_select %p252, %s251, 0
          %p254 = scmp.lt.s32.totalorder %s253, 7
          %s255 = scalar_select %p254, %s253, 7
          %s256 = smul.addr %s255, 16
          %s257 = scalar_lea.hbm %s2, %s256
          %s258 = scalar_lea.vmem [#allocation2], 4
          %s259 = scalar_lea.sflag [#allocation3], 4
          // Predicated region
          $region81: #{tpu_custom_call.1} parent=79 // pred_check
            _
          $region82: #{tpu_custom_call.1} parent=79 // pred_check_branch
            %261 = sbr.rel target = $region84
          $region83: #{tpu_custom_call.1} parent=79 // pred_region
            %262 = sst [smem:[#allocation10]] [#allocation27]
            %263 = sst [smem:[#allocation11]] [#allocation26]
          $region84: #{tpu_custom_call.1} parent=79 // pred_fallthru
            _
          %265 = shalt.err (0)
          %s267 = sshll.u32 %s258, 4
          %s268 = int_to_ptr.vmem [resolvable:$true] %s267
          %270 = dma.hbm_to_vmem [thread:$0]  %s257, 16, %s268, %s259
        $region80: #{tpu_custom_call.1} parent=11 // pred_fallthru
          _
        %p271 = scmp.lt.s32.totalorder %s246, 32100
        // Predicated region
        $region85: #{tpu_custom_call.1} parent=11 // pred_check
          %p272 = pneg %p271
        $region86: #{tpu_custom_call.1} parent=11 // pred_check_branch
          %274 = sbr.rel (%p272) target = $region88
        $region87: #{tpu_custom_call.1} parent=11 // pred_region
          %p275 = scmp.gt.s32.totalorder %s246, 0
          %s276 = scalar_select %p275, %s246, 0
          %p277 = scmp.lt.s32.totalorder %s276, 32099
          %s278 = scalar_select %p277, %s276, 32099
          %s279 = smul.addr %s278, 16
          %s280 = scalar_lea.hbm %s1, %s279
          %s281 = scalar_lea.vmem [#allocation2], 4
          %s282 = scalar_lea.sflag [#allocation3], 4
          // Predicated region
          $region89: #{tpu_custom_call.1} parent=87 // pred_check
            _
          $region90: #{tpu_custom_call.1} parent=87 // pred_check_branch
            %284 = sbr.rel target = $region92
          $region91: #{tpu_custom_call.1} parent=87 // pred_region
            %285 = sst [smem:[#allocation10]] [#allocation29]
            %286 = sst [smem:[#allocation11]] [#allocation28]
          $region92: #{tpu_custom_call.1} parent=87 // pred_fallthru
            _
          %288 = shalt.err (0)
          %s290 = sshll.u32 %s281, 4
          %s291 = int_to_ptr.vmem [resolvable:$true] %s290
          %293 = dma.hbm_to_vmem [thread:$0]  %s280, 16, %s291, %s282
        $region88: #{tpu_custom_call.1} parent=11 // pred_fallthru
          _
        %s294 = sadd.s32 %s53, 5
        %s295 = sld [smem:[#allocation5 + %s294]]
        %p296 = scmp.ge.s32.totalorder %s295, 32100
        // Predicated region
        $region93: #{tpu_custom_call.1} parent=11 // pred_check
          %p297 = pneg %p296
        $region94: #{tpu_custom_call.1} parent=11 // pred_check_branch
          %299 = sbr.rel (%p297) target = $region96
        $region95: #{tpu_custom_call.1} parent=11 // pred_region
          %s300 = ssub.s32 %s295, 32100
          %p301 = scmp.gt.s32.totalorder %s300, 0
          %s302 = scalar_select %p301, %s300, 0
          %p303 = scmp.lt.s32.totalorder %s302, 7
          %s304 = scalar_select %p303, %s302, 7
          %s305 = smul.addr %s304, 16
          %s306 = scalar_lea.hbm %s2, %s305
          %s307 = scalar_lea.vmem [#allocation2], 5
          %s308 = scalar_lea.sflag [#allocation3], 5
          // Predicated region
          $region97: #{tpu_custom_call.1} parent=95 // pred_check
            _
          $region98: #{tpu_custom_call.1} parent=95 // pred_check_branch
            %310 = sbr.rel target = $region100
          $region99: #{tpu_custom_call.1} parent=95 // pred_region
            %311 = sst [smem:[#allocation10]] [#allocation31]
            %312 = sst [smem:[#allocation11]] [#allocation30]
          $region100: #{tpu_custom_call.1} parent=95 // pred_fallthru
            _
          %314 = shalt.err (0)
          %s316 = sshll.u32 %s307, 4
          %s317 = int_to_ptr.vmem [resolvable:$true] %s316
          %319 = dma.hbm_to_vmem [thread:$0]  %s306, 16, %s317, %s308
        $region96: #{tpu_custom_call.1} parent=11 // pred_fallthru
          _
        %p320 = scmp.lt.s32.totalorder %s295, 32100
        // Predicated region
        $region101: #{tpu_custom_call.1} parent=11 // pred_check
          %p321 = pneg %p320
        $region102: #{tpu_custom_call.1} parent=11 // pred_check_branch
          %323 = sbr.rel (%p321) target = $region104
        $region103: #{tpu_custom_call.1} parent=11 // pred_region
          %p324 = scmp.gt.s32.totalorder %s295, 0
          %s325 = scalar_select %p324, %s295, 0
          %p326 = scmp.lt.s32.totalorder %s325, 32099
          %s327 = scalar_select %p326, %s325, 32099
          %s328 = smul.addr %s327, 16
          %s329 = scalar_lea.hbm %s1, %s328
          %s330 = scalar_lea.vmem [#allocation2], 5
          %s331 = scalar_lea.sflag [#allocation3], 5
          // Predicated region
          $region105: #{tpu_custom_call.1} parent=103 // pred_check
            _
          $region106: #{tpu_custom_call.1} parent=103 // pred_check_branch
            %333 = sbr.rel target = $region108
          $region107: #{tpu_custom_call.1} parent=103 // pred_region
            %334 = sst [smem:[#allocation10]] [#allocation33]
            %335 = sst [smem:[#allocation11]] [#allocation32]
          $region108: #{tpu_custom_call.1} parent=103 // pred_fallthru
            _
          %337 = shalt.err (0)
          %s339 = sshll.u32 %s330, 4
          %s340 = int_to_ptr.vmem [resolvable:$true] %s339
          %342 = dma.hbm_to_vmem [thread:$0]  %s329, 16, %s340, %s331
        $region104: #{tpu_custom_call.1} parent=11 // pred_fallthru
          _
        %s343 = sadd.s32 %s53, 6
        %s344 = sld [smem:[#allocation5 + %s343]]
        %p345 = scmp.ge.s32.totalorder %s344, 32100
        // Predicated region
        $region109: #{tpu_custom_call.1} parent=11 // pred_check
          %p346 = pneg %p345
        $region110: #{tpu_custom_call.1} parent=11 // pred_check_branch
          %348 = sbr.rel (%p346) target = $region112
        $region111: #{tpu_custom_call.1} parent=11 // pred_region
          %s349 = ssub.s32 %s344, 32100
          %p350 = scmp.gt.s32.totalorder %s349, 0
          %s351 = scalar_select %p350, %s349, 0
          %p352 = scmp.lt.s32.totalorder %s351, 7
          %s353 = scalar_select %p352, %s351, 7
          %s354 = smul.addr %s353, 16
          %s355 = scalar_lea.hbm %s2, %s354
          %s356 = scalar_lea.vmem [#allocation2], 6
          %s357 = scalar_lea.sflag [#allocation3], 6
          // Predicated region
          $region113: #{tpu_custom_call.1} parent=111 // pred_check
            _
          $region114: #{tpu_custom_call.1} parent=111 // pred_check_branch
            %359 = sbr.rel target = $region116
          $region115: #{tpu_custom_call.1} parent=111 // pred_region
            %360 = sst [smem:[#allocation10]] [#allocation35]
            %361 = sst [smem:[#allocation11]] [#allocation34]
          $region116: #{tpu_custom_call.1} parent=111 // pred_fallthru
            _
          %363 = shalt.err (0)
          %s365 = sshll.u32 %s356, 4
          %s366 = int_to_ptr.vmem [resolvable:$true] %s365
          %368 = dma.hbm_to_vmem [thread:$0]  %s355, 16, %s366, %s357
        $region112: #{tpu_custom_call.1} parent=11 // pred_fallthru
          _
        %p369 = scmp.lt.s32.totalorder %s344, 32100
        // Predicated region
        $region117: #{tpu_custom_call.1} parent=11 // pred_check
          %p370 = pneg %p369
        $region118: #{tpu_custom_call.1} parent=11 // pred_check_branch
          %372 = sbr.rel (%p370) target = $region120
        $region119: #{tpu_custom_call.1} parent=11 // pred_region
          %p373 = scmp.gt.s32.totalorder %s344, 0
          %s374 = scalar_select %p373, %s344, 0
          %p375 = scmp.lt.s32.totalorder %s374, 32099
          %s376 = scalar_select %p375, %s374, 32099
          %s377 = smul.addr %s376, 16
          %s378 = scalar_lea.hbm %s1, %s377
          %s379 = scalar_lea.vmem [#allocation2], 6
          %s380 = scalar_lea.sflag [#allocation3], 6
          // Predicated region
          $region121: #{tpu_custom_call.1} parent=119 // pred_check
            _
          $region122: #{tpu_custom_call.1} parent=119 // pred_check_branch
            %382 = sbr.rel target = $region124
          $region123: #{tpu_custom_call.1} parent=119 // pred_region
            %383 = sst [smem:[#allocation10]] [#allocation37]
            %384 = sst [smem:[#allocation11]] [#allocation36]
          $region124: #{tpu_custom_call.1} parent=119 // pred_fallthru
            _
          %386 = shalt.err (0)
          %s388 = sshll.u32 %s379, 4
          %s389 = int_to_ptr.vmem [resolvable:$true] %s388
          %391 = dma.hbm_to_vmem [thread:$0]  %s378, 16, %s389, %s380
        $region120: #{tpu_custom_call.1} parent=11 // pred_fallthru
          _
        %s392 = sadd.s32 %s53, 7
        %s393 = sld [smem:[#allocation5 + %s392]]
        %p394 = scmp.ge.s32.totalorder %s393, 32100
        // Predicated region
        $region125: #{tpu_custom_call.1} parent=11 // pred_check
          %p395 = pneg %p394
        $region126: #{tpu_custom_call.1} parent=11 // pred_check_branch
          %397 = sbr.rel (%p395) target = $region128
        $region127: #{tpu_custom_call.1} parent=11 // pred_region
          %s398 = ssub.s32 %s393, 32100
          %p399 = scmp.gt.s32.totalorder %s398, 0
          %s400 = scalar_select %p399, %s398, 0
          %p401 = scmp.lt.s32.totalorder %s400, 7
          %s402 = scalar_select %p401, %s400, 7
          %s403 = smul.addr %s402, 16
          %s404 = scalar_lea.hbm %s2, %s403
          %s405 = scalar_lea.vmem [#allocation2], 7
          %s406 = scalar_lea.sflag [#allocation3], 7
          // Predicated region
          $region129: #{tpu_custom_call.1} parent=127 // pred_check
            _
          $region130: #{tpu_custom_call.1} parent=127 // pred_check_branch
            %408 = sbr.rel target = $region132
          $region131: #{tpu_custom_call.1} parent=127 // pred_region
            %409 = sst [smem:[#allocation10]] [#allocation39]
            %410 = sst [smem:[#allocation11]] [#allocation38]
          $region132: #{tpu_custom_call.1} parent=127 // pred_fallthru
            _
          %412 = shalt.err (0)
          %s414 = sshll.u32 %s405, 4
          %s415 = int_to_ptr.vmem [resolvable:$true] %s414
          %417 = dma.hbm_to_vmem [thread:$0]  %s404, 16, %s415, %s406
        $region128: #{tpu_custom_call.1} parent=11 // pred_fallthru
          _
        %p418 = scmp.lt.s32.totalorder %s393, 32100
        // Predicated region
        $region133: #{tpu_custom_call.1} parent=11 // pred_check
          %p419 = pneg %p418
        $region134: #{tpu_custom_call.1} parent=11 // pred_check_branch
          %421 = sbr.rel (%p419) target = $region136
        $region135: #{tpu_custom_call.1} parent=11 // pred_region
          %p422 = scmp.gt.s32.totalorder %s393, 0
          %s423 = scalar_select %p422, %s393, 0
          %p424 = scmp.lt.s32.totalorder %s423, 32099
          %s425 = scalar_select %p424, %s423, 32099
          %s426 = smul.addr %s425, 16
          %s427 = scalar_lea.hbm %s1, %s426
          %s428 = scalar_lea.vmem [#allocation2], 7
          %s429 = scalar_lea.sflag [#allocation3], 7
          // Predicated region
          $region137: #{tpu_custom_call.1} parent=135 // pred_check
            _
          $region138: #{tpu_custom_call.1} parent=135 // pred_check_branch
            %431 = sbr.rel target = $region140
          $region139: #{tpu_custom_call.1} parent=135 // pred_region
            %432 = sst [smem:[#allocation10]] [#allocation41]
            %433 = sst [smem:[#allocation11]] [#allocation40]
          $region140: #{tpu_custom_call.1} parent=135 // pred_fallthru
            _
          %435 = shalt.err (0)
          %s437 = sshll.u32 %s428, 4
          %s438 = int_to_ptr.vmem [resolvable:$true] %s437
          %440 = dma.hbm_to_vmem [thread:$0]  %s427, 16, %s438, %s429
        $region136: #{tpu_custom_call.1} parent=11 // pred_fallthru
          _
        %s441 = smul.u32 1, 1
        %s442 = sshll.u32 %s441, 4
        %443 = dma.done [#allocation3], %s442
        %s444 = scalar_lea.sflag [#allocation3], 1
        %s445 = sshll.u32 %s441, 4
        %446 = dma.done %s444, %s445
        %s447 = scalar_lea.sflag [#allocation3], 2
        %s448 = sshll.u32 %s441, 4
        %449 = dma.done %s447, %s448
        %s450 = scalar_lea.sflag [#allocation3], 3
        %s451 = sshll.u32 %s441, 4
        %452 = dma.done %s450, %s451
        %s453 = scalar_lea.sflag [#allocation3], 4
        %s454 = sshll.u32 %s441, 4
        %455 = dma.done %s453, %s454
        %s456 = scalar_lea.sflag [#allocation3], 5
        %s457 = sshll.u32 %s441, 4
        %458 = dma.done %s456, %s457
        %s459 = scalar_lea.sflag [#allocation3], 6
        %s460 = sshll.u32 %s441, 4
        %461 = dma.done %s459, %s460
        %s462 = scalar_lea.sflag [#allocation3], 7
        %s463 = sshll.u32 %s441, 4
        %464 = dma.done %s462, %s463
        %v465 = vld [vmem:[#allocation2] sm:$0xff]
        %466 = vst [vmem:[%s52] sm:$0xff] %v465
        %s467 = sand.u32 %s25, 1
        %s468 = scalar_lea.sflag [#allocation7], %s467
        %s469 = sand.u32 %s25, 1
        %s470 = smul.addr %s469, 8
        %s471 = scalar_lea.vmem [#allocation6], %s470
        // Predicated region
        $region141: #{tpu_custom_call.1} parent=11 // pred_check
          %p472 = pneg %p31
        $region142: #{tpu_custom_call.1} parent=11 // pred_check_branch
          %474 = sbr.rel (%p472) target = $region144
        $region143: #{tpu_custom_call.1} parent=11 // pred_region
          %s476 = ssub.s32 128, 128
          %477 = vsyncadd %s468, %s476
          %s478 = smul.addr %s16, 128
          %s479 = scalar_lea.hbm %s3, %s478
          %s481 = sshll.u32 %s471, 4
          %s482 = int_to_ptr.vmem [resolvable:$true] %s481
          %484 = dma.vmem_to_hbm [thread:$0]  %s482, 128, %s479, %s468
        $region144: #{tpu_custom_call.1} parent=11 // pred_fallthru
          _
      $region12: #{tpu_custom_call.1} parent=5 // pred_fallthru
        _
      %p485 = scmp.le.s32.totalorder 1, %s16
      // Predicated region
      $region145: #{tpu_custom_call.1} parent=5 // pred_check
        %p486 = pneg %p485
      $region146: #{tpu_custom_call.1} parent=5 // pred_check_branch
        %488 = sbr.rel (%p486) target = $region148
      $region147: #{tpu_custom_call.1} parent=5 // pred_region
        %s489 = ssub.s32 %s16, 1
        // Predicated region
        $region149: #{tpu_custom_call.1} parent=147 // pred_check
          %p490 = pneg %p37
        $region150: #{tpu_custom_call.1} parent=147 // pred_check_branch
          %492 = sbr.rel (%p490) target = $region152
        $region151: #{tpu_custom_call.1} parent=147 // pred_region
          %s493 = sand.u32 %s28, 1
          %s494 = scalar_lea.sflag [#allocation7], %s493
          %s495 = sand.u32 %s28, 1
          %s496 = smul.addr %s495, 8
          %s497 = scalar_lea.vmem [#allocation6], %s496
          %498 = dma.done %s494, 128
        $region152: #{tpu_custom_call.1} parent=147 // pred_fallthru
          _
      $region148: #{tpu_custom_call.1} parent=5 // pred_fallthru
        _
    $region6: #{tpu_custom_call.1} parent=1 // loop_footer
      %s20 = sadd.s32 1, %s16
    $region7: #{tpu_custom_call.1} parent=1 // loop_footer_branch
      %15 = sbr.rel target = $region3
    $region8: #{tpu_custom_call.1} parent=1 // loop_exit
      _
    %499 = vsyncpa [#allocation7], 1
    %s500 = scalar_lea.sflag [#allocation7], 1
    %501 = vsyncpa %s500, 1
  %502 = vsyncmov [#allocation3]
  %s503 = vpop.sfrf %502
  %p504 = scmp.eq.s32.totalorder %s503, 0
  %p505 = pneg %p504
  %507 = shalt.err (%p505)
  %s508 = scalar_lea.sflag [#allocation3], 1
  %509 = vsyncmov %s508
  %s510 = vpop.sfrf %509
  %p511 = scmp.eq.s32.totalorder %s510, 0
  %p512 = pneg %p511
  %514 = shalt.err (%p512)
  %s515 = scalar_lea.sflag [#allocation3], 2
  %516 = vsyncmov %s515
  %s517 = vpop.sfrf %516
  %p518 = scmp.eq.s32.totalorder %s517, 0
  %p519 = pneg %p518
  %521 = shalt.err (%p519)
  %s522 = scalar_lea.sflag [#allocation3], 3
  %523 = vsyncmov %s522
  %s524 = vpop.sfrf %523
  %p525 = scmp.eq.s32.totalorder %s524, 0
  %p526 = pneg %p525
  %528 = shalt.err (%p526)
  %s529 = scalar_lea.sflag [#allocation3], 4
  %530 = vsyncmov %s529
  %s531 = vpop.sfrf %530
  %p532 = scmp.eq.s32.totalorder %s531, 0
  %p533 = pneg %p532
  %535 = shalt.err (%p533)
  %s536 = scalar_lea.sflag [#allocation3], 5
  %537 = vsyncmov %s536
  %s538 = vpop.sfrf %537
  %p539 = scmp.eq.s32.totalorder %s538, 0
  %p540 = pneg %p539
  %542 = shalt.err (%p540)
  %s543 = scalar_lea.sflag [#allocation3], 6
  %544 = vsyncmov %s543
  %s545 = vpop.sfrf %544
  %p546 = scmp.eq.s32.totalorder %s545, 0
  %p547 = pneg %p546
  %549 = shalt.err (%p547)
  %s550 = scalar_lea.sflag [#allocation3], 7
  %551 = vsyncmov %s550
  %s552 = vpop.sfrf %551
  %p553 = scmp.eq.s32.totalorder %s552, 0
  %p554 = pneg %p553
  %556 = shalt.err (%p554)

</llo_original>
